<compile_context>
chip_gen: v7x
topology: tpu7x:2x2x1
jax: 0.10.0
libtpu: 0.0.40
codegen_flags: <defaults>
</compile_context>

<pallas_src>
import functools

import jax
import jax.numpy as jnp
from jax.experimental import pallas as pl
from jax.experimental.pallas import tpu as pltpu


def _round_up(n, m):
    return ((n + m - 1) // m) * m


def ddqn_kernel(x_ref, w1_ref, b1_ref, wh_ref, bh_ref, w2_ref, b2_ref, q_ref,
                *, action_dim, v_col):
    x = x_ref[...]

    # fc1 + ReLU
    h = jnp.dot(x, w1_ref[...], preferred_element_type=jnp.float32) + b1_ref[...]
    h = jnp.maximum(h, 0.0)

    # fused value/advantage hidden layer: one MXU matmul -> [TB, 512]
    va = jnp.dot(h, wh_ref[...], preferred_element_type=jnp.float32) + bh_ref[...]
    va = jnp.maximum(va, 0.0)

    # fused block-diagonal output matmul -> lane-dense [TB, 128]:
    #   cols 0..action_dim-1 = A, col v_col = V, remaining cols are exact zeros
    out = jnp.dot(va, w2_ref[...], preferred_element_type=jnp.float32) + b2_ref[...]

    V = out[:, v_col:v_col + 1]                               # [TB, 1]
    # padded cols are exactly 0, so sum(out) = sum(A) + V
    a_sum = jnp.sum(out, axis=1, keepdims=True) - V
    a_mean = a_sum * (1.0 / action_dim)                       # mean over REAL actions only

    # Q = V + A - mean(A); only cols [:action_dim] are meaningful (wrapper slices)
    q_ref[...] = (out + V - a_mean).astype(q_ref.dtype)


def fuse_params(params, action_dim, out_pad):
    """Fuse the 5 linears into 3 lane-dense matmuls. Done once in the wrapper."""
    (w1, b1, wv1, bv1, wv2, bv2, wa1, ba1, wa2, ba2) = params
    head = wv1.shape[1]               # 256
    v_col = out_pad - 1
    assert action_dim <= v_col, "action_dim must fit below the V column"

    # [hidden, 512] / [1, 512]: value branch first, advantage branch second
    w_heads = jnp.concatenate([wv1, wa1], axis=1)
    b_heads = jnp.concatenate([bv1, ba1], axis=1)

    # block-diagonal [512, out_pad]: value path -> last col, advantage -> first cols
    w2 = jnp.zeros((2 * head, out_pad), jnp.float32)
    w2 = w2.at[:head, v_col:v_col + 1].set(wv2)
    w2 = w2.at[head:, :action_dim].set(wa2)
    b2 = jnp.zeros((1, out_pad), jnp.float32)
    b2 = b2.at[:, v_col:v_col + 1].set(bv2)
    b2 = b2.at[:, :action_dim].set(ba2)
    return (w1, b1, w_heads, b_heads, w2, b2), v_col


def ddqn_forward(x, params, action_dim, *, tile_b=256):
    B, S = x.shape
    out_pad = _round_up(action_dim + 1, 128)                  # lane-dense output width
    (w1, b1, wh, bh, w2, b2), v_col = fuse_params(params, action_dim, out_pad)
    H = w1.shape[1]
    H2 = wh.shape[1]                                          # 512

    # Tile the batch; weights stay resident across grid steps.
    tb = tile_b if B >= tile_b else _round_up(B, 8)
    Bp = _round_up(B, tb)
    if Bp != B:
        x = jnp.pad(x, ((0, Bp - B), (0, 0)))
    grid = (Bp // tb,)

    kernel = functools.partial(ddqn_kernel, action_dim=action_dim, v_col=v_col)

    q_pad = pl.pallas_call(
        kernel,
        out_shape=jax.ShapeDtypeStruct((Bp, out_pad), jnp.float32),
        grid_spec=pltpu.PrefetchScalarGridSpec(
            num_scalar_prefetch=0,
            grid=grid,
            in_specs=[
                pl.BlockSpec((tb, S), lambda i: (i, 0)),        # x: tiled over batch
                pl.BlockSpec((S, H), lambda i: (0, 0)),         # weights: constant block
                pl.BlockSpec((1, H), lambda i: (0, 0)),         #  -> VMEM resident
                pl.BlockSpec((H, H2), lambda i: (0, 0)),
                pl.BlockSpec((1, H2), lambda i: (0, 0)),
                pl.BlockSpec((H2, out_pad), lambda i: (0, 0)),
                pl.BlockSpec((1, out_pad), lambda i: (0, 0)),
            ],
            out_specs=pl.BlockSpec((tb, out_pad), lambda i: (i, 0)),
        ),
        compiler_params=pltpu.CompilerParams(
            dimension_semantics=("parallel",)),                 # v7x: both TCs on batch
    )(x, w1, b1, wh, bh, w2, b2)

    return q_pad[:B, :action_dim]


def init_params(key, state_dim, action_dim, hidden_dim):
    """Deterministic init mimicking nn.Linear's uniform(-1/sqrt(fan_in), +)."""
    def linear(key, fan_in, fan_out):
        kw, kb = jax.random.split(key)
        bound = 1.0 / jnp.sqrt(fan_in)
        w = jax.random.uniform(kw, (fan_in, fan_out), jnp.float32, -bound, bound)
        b = jax.random.uniform(kb, (1, fan_out), jnp.float32, -bound, bound)
        return w, b

    k1, k2, k3, k4, k5 = jax.random.split(key, 5)
    w1, b1 = linear(k1, state_dim, hidden_dim)      # fc1
    wv1, bv1 = linear(k2, hidden_dim, 256)          # fc_value
    wv2, bv2 = linear(k3, 256, 1)                   # value
    wa1, ba1 = linear(k4, hidden_dim, 256)          # fc_advantages
    wa2, ba2 = linear(k5, 256, action_dim)          # advantages
    return (w1, b1, wv1, bv1, wv2, bv2, wa1, ba1, wa2, ba2)


def ddqn_reference(x, params):
    (w1, b1, wv1, bv1, wv2, bv2, wa1, ba1, wa2, ba2) = params
    h = jax.nn.relu(x @ w1 + b1)
    v = jax.nn.relu(h @ wv1 + bv1)
    V = v @ wv2 + bv2
    a = jax.nn.relu(h @ wa1 + ba1)
    A = a @ wa2 + ba2
    return V + A - jnp.mean(A, axis=1, keepdims=True)


if __name__ == "__main__":
    batch = 8
    state_dim = 16
    action_dim = 6
    hidden_dim = 128   # lane-aligned small hidden (module default is 256; same math)

    key = jax.random.PRNGKey(0)
    kx, kp = jax.random.split(key)
    x = jax.random.normal(kx, (batch, state_dim), jnp.float32)
    params = init_params(kp, state_dim, action_dim, hidden_dim)

    q = ddqn_forward(x, params, action_dim)
    q = jax.block_until_ready(q)

    q_ref = ddqn_reference(x, params)
    assert q.shape == (batch, action_dim)
    assert jnp.allclose(q, q_ref, atol=1e-4, rtol=1e-4), "mismatch vs reference"

    print("KERNEL_OK")
</pallas_src>

<mosaic_0001>
module attributes {stable_mosaic.version = 11 : i64} {
  func.func @ddqn_kernel(%arg0: i32, %arg1: memref<8x16xf32, #tpu.memory_space<vmem>>, %arg2: memref<16x128xf32, #tpu.memory_space<vmem>>, %arg3: memref<1x128xf32, #tpu.memory_space<vmem>>, %arg4: memref<128x512xf32, #tpu.memory_space<vmem>>, %arg5: memref<1x512xf32, #tpu.memory_space<vmem>>, %arg6: memref<512x128xf32, #tpu.memory_space<vmem>>, %arg7: memref<1x128xf32, #tpu.memory_space<vmem>>, %arg8: memref<8x128xf32, #tpu.memory_space<vmem>>) attributes {dimension_semantics = [#tpu.dimension_semantics<parallel>], iteration_bounds = array<i64: 1>, scalar_prefetch = 0 : i64, scratch_operands = 0 : i64, tpu.core_type = #tpu.core_type<tc>, window_params = [{transform_indices = @transform_0, window_bounds = array<i64: 8, 16>}, {pipeline_mode = #tpu.pipeline_mode<synchronous>, transform_indices = @transform_1, window_bounds = array<i64: 16, 128>}, {pipeline_mode = #tpu.pipeline_mode<synchronous>, transform_indices = @transform_2, window_bounds = array<i64: 1, 128>}, {pipeline_mode = #tpu.pipeline_mode<synchronous>, transform_indices = @transform_3, window_bounds = array<i64: 128, 512>}, {pipeline_mode = #tpu.pipeline_mode<synchronous>, transform_indices = @transform_4, window_bounds = array<i64: 1, 512>}, {pipeline_mode = #tpu.pipeline_mode<synchronous>, transform_indices = @transform_5, window_bounds = array<i64: 512, 128>}, {pipeline_mode = #tpu.pipeline_mode<synchronous>, transform_indices = @transform_6, window_bounds = array<i64: 1, 128>}, {transform_indices = @transform_7, window_bounds = array<i64: 8, 128>}]} {
    %c0 = arith.constant 0 : index
    %c0_0 = arith.constant 0 : index
    %0 = vector.load %arg1[%c0, %c0_0] : memref<8x16xf32, #tpu.memory_space<vmem>>, vector<8x16xf32>
    %c0_1 = arith.constant 0 : index
    %c0_2 = arith.constant 0 : index
    %1 = vector.load %arg2[%c0_1, %c0_2] : memref<16x128xf32, #tpu.memory_space<vmem>>, vector<16x128xf32>
    %cst = arith.constant dense<0.000000e+00> : vector<8x128xf32>
    %2 = tpu.matmul %0, %1, %cst {dimension_numbers = #tpu.dot_dimension_numbers<[1], [0], [0], [1], [0, 0, 1, 1], [], []>} : vector<8x16xf32>, vector<16x128xf32>, vector<8x128xf32> -> vector<8x128xf32>
    %c0_3 = arith.constant 0 : index
    %c0_4 = arith.constant 0 : index
    %3 = vector.load %arg3[%c0_3, %c0_4] : memref<1x128xf32, #tpu.memory_space<vmem>>, vector<1x128xf32>
    %4 = vector.broadcast %3 : vector<1x128xf32> to vector<8x128xf32>
    %5 = arith.addf %2, %4 : vector<8x128xf32>
    %cst_5 = arith.constant 0.000000e+00 : f32
    %6 = vector.broadcast %cst_5 : f32 to vector<8x128xf32>
    %7 = arith.maximumf %5, %6 : vector<8x128xf32>
    %c0_6 = arith.constant 0 : index
    %c0_7 = arith.constant 0 : index
    %8 = vector.load %arg4[%c0_6, %c0_7] : memref<128x512xf32, #tpu.memory_space<vmem>>, vector<128x512xf32>
    %cst_8 = arith.constant dense<0.000000e+00> : vector<8x512xf32>
    %9 = tpu.matmul %7, %8, %cst_8 {dimension_numbers = #tpu.dot_dimension_numbers<[1], [0], [0], [1], [0, 0, 1, 1], [], []>} : vector<8x128xf32>, vector<128x512xf32>, vector<8x512xf32> -> vector<8x512xf32>
    %c0_9 = arith.constant 0 : index
    %c0_10 = arith.constant 0 : index
    %10 = vector.load %arg5[%c0_9, %c0_10] : memref<1x512xf32, #tpu.memory_space<vmem>>, vector<1x512xf32>
    %11 = vector.broadcast %10 : vector<1x512xf32> to vector<8x512xf32>
    %12 = arith.addf %9, %11 : vector<8x512xf32>
    %cst_11 = arith.constant 0.000000e+00 : f32
    %13 = vector.broadcast %cst_11 : f32 to vector<8x512xf32>
    %14 = arith.maximumf %12, %13 : vector<8x512xf32>
    %c0_12 = arith.constant 0 : index
    %c0_13 = arith.constant 0 : index
    %15 = vector.load %arg6[%c0_12, %c0_13] : memref<512x128xf32, #tpu.memory_space<vmem>>, vector<512x128xf32>
    %cst_14 = arith.constant dense<0.000000e+00> : vector<8x128xf32>
    %16 = tpu.matmul %14, %15, %cst_14 {dimension_numbers = #tpu.dot_dimension_numbers<[1], [0], [0], [1], [0, 0, 1, 1], [], []>} : vector<8x512xf32>, vector<512x128xf32>, vector<8x128xf32> -> vector<8x128xf32>
    %c0_15 = arith.constant 0 : index
    %c0_16 = arith.constant 0 : index
    %17 = vector.load %arg7[%c0_15, %c0_16] : memref<1x128xf32, #tpu.memory_space<vmem>>, vector<1x128xf32>
    %18 = vector.broadcast %17 : vector<1x128xf32> to vector<8x128xf32>
    %19 = arith.addf %16, %18 : vector<8x128xf32>
    %20 = vector.extract_strided_slice %19 {offsets = [0, 127], sizes = [8, 1], strides = [1, 1]} : vector<8x128xf32> to vector<8x1xf32>
    %cst_17 = arith.constant dense<0.000000e+00> : vector<8xf32>
    %21 = vector.multi_reduction <add>, %19, %cst_17 [1] : vector<8x128xf32> to vector<8xf32>
    %22 = vector.shape_cast %21 : vector<8xf32> to vector<8x1xf32>
    %23 = arith.subf %22, %20 : vector<8x1xf32>
    %cst_18 = arith.constant 0.166666672 : f32
    %24 = vector.broadcast %cst_18 : f32 to vector<8x1xf32>
    %25 = arith.mulf %23, %24 : vector<8x1xf32>
    %26 = vector.broadcast %20 : vector<8x1xf32> to vector<8x128xf32>
    %27 = arith.addf %19, %26 : vector<8x128xf32>
    %28 = vector.broadcast %25 : vector<8x1xf32> to vector<8x128xf32>
    %29 = arith.subf %27, %28 : vector<8x128xf32>
    %c0_19 = arith.constant 0 : index
    %c0_20 = arith.constant 0 : index
    %30 = vector.load %arg8[%c0_19, %c0_20] : memref<8x128xf32, #tpu.memory_space<vmem>>, vector<8x128xf32>
    tpu.vector_store %arg8[%c0_19, %c0_20], %29 {strides = array<i32>} : memref<8x128xf32, #tpu.memory_space<vmem>>, vector<8x128xf32>,
    return
  }
  func.func @transform_0(%arg0: i32) -> (i32, i32) {
    %c0_i32 = arith.constant 0 : i32
    %c0_i32_0 = arith.constant 0 : i32
    return %arg0, %c0_i32 : i32, i32
  }
  func.func @transform_1(%arg0: i32) -> (i32, i32) {
    %c0_i32 = arith.constant 0 : i32
    %c0_i32_0 = arith.constant 0 : i32
    %c0_i32_1 = arith.constant 0 : i32
    return %c0_i32, %c0_i32_0 : i32, i32
  }
  func.func @transform_2(%arg0: i32) -> (i32, i32) {
    %c0_i32 = arith.constant 0 : i32
    %c0_i32_0 = arith.constant 0 : i32
    %c0_i32_1 = arith.constant 0 : i32
    return %c0_i32, %c0_i32_0 : i32, i32
  }
  func.func @transform_3(%arg0: i32) -> (i32, i32) {
    %c0_i32 = arith.constant 0 : i32
    %c0_i32_0 = arith.constant 0 : i32
    %c0_i32_1 = arith.constant 0 : i32
    return %c0_i32, %c0_i32_0 : i32, i32
  }
  func.func @transform_4(%arg0: i32) -> (i32, i32) {
    %c0_i32 = arith.constant 0 : i32
    %c0_i32_0 = arith.constant 0 : i32
    %c0_i32_1 = arith.constant 0 : i32
    return %c0_i32, %c0_i32_0 : i32, i32
  }
  func.func @transform_5(%arg0: i32) -> (i32, i32) {
    %c0_i32 = arith.constant 0 : i32
    %c0_i32_0 = arith.constant 0 : i32
    %c0_i32_1 = arith.constant 0 : i32
    return %c0_i32, %c0_i32_0 : i32, i32
  }
  func.func @transform_6(%arg0: i32) -> (i32, i32) {
    %c0_i32 = arith.constant 0 : i32
    %c0_i32_0 = arith.constant 0 : i32
    %c0_i32_1 = arith.constant 0 : i32
    return %c0_i32, %c0_i32_0 : i32, i32
  }
  func.func @transform_7(%arg0: i32) -> (i32, i32) {
    %c0_i32 = arith.constant 0 : i32
    %c0_i32_0 = arith.constant 0 : i32
    return %arg0, %c0_i32 : i32, i32
  }
}

</mosaic_0001>

<llo_original>
// kernel: tpu_custom_call.1
$region0: #{tpu_custom_call.1}
  #allocation0 [shape = 'u32[]', space=smem, size = 0x4, offset = 0x4, fixed_abs, tag = 'smem constant byte address 0x4 - core index']
  #allocation1 [shape = 'u32[144,128]{1,0:T(1,128)}', space=vmem, size = 0x12000, scoped, tag = 'internal scratch']
  %s0 = inlined_call_operand.hbm [shape: f32[8,16], index: 0, kind: input, shape index: {}]
  %s1 = inlined_call_operand.hbm [shape: f32[16,128], index: 1, kind: input, shape index: {}]
  %s2 = inlined_call_operand.vmem [shape: f32[1,128], index: 2, kind: input, shape index: {}]
  %s3 = inlined_call_operand.hbm [shape: f32[128,512], index: 3, kind: input, shape index: {}]
  %s4 = inlined_call_operand.vmem [shape: f32[1,512], index: 4, kind: input, shape index: {}]
  %s5 = inlined_call_operand.hbm [shape: f32[512,128], index: 5, kind: input, shape index: {}]
  %s6 = inlined_call_operand.vmem [shape: f32[1,128], index: 6, kind: input, shape index: {}]
  %s7 = inlined_call_operand.hbm [shape: f32[8,128], index: 7, kind: output, shape index: {}]
  %s8 = sld [smem:[#allocation0]]
  $region54: #{tpu_custom_call.1} parent=0
    _
  %s10 = ssub.s32 1, %s8
  %s11 = scalar_select 0, %s10, %s8
  $region1: #{tpu_custom_call.1} parent=0
    #allocation2 [shape = 'u8[4096]{0}', space=vmem, size = 0x1000, scoped, tag = 'input window, operand 0, single buffered']
    #allocation3 [shape = 's32[1]{0}', space=sflag, size = 0x4, scoped, tag = 'scoped memory for tpu_custom_call.1']
    #allocation4 [shape = 's32[1]{0}', space=sflag, size = 0x4, scoped, tag = 'scoped memory for tpu_custom_call.1']
    #allocation5 [shape = 'u8[8192]{0}', space=vmem, size = 0x2000, scoped, tag = 'input window, operand 1, single buffered']
    #allocation6 [shape = 's32[1]{0}', space=sflag, size = 0x4, scoped, tag = 'scoped memory for tpu_custom_call.1']
    #allocation7 [shape = 'u8[262144]{0}', space=vmem, size = 0x40000, scoped, tag = 'input window, operand 3, single buffered']
    #allocation8 [shape = 'u8[262144]{0}', space=vmem, size = 0x40000, scoped, tag = 'input window, operand 5, single buffered']
    #allocation9 [shape = 's32[1]{0}', space=sflag, size = 0x4, scoped, tag = 'scoped memory for tpu_custom_call.1']
    #allocation10 [shape = 'u8[4096]{0}', space=vmem, size = 0x1000, scoped, tag = 'output window, operand 0, single buffered']
    %12 = vsyncpa [#allocation3], 0
    %13 = vsyncpa [#allocation6], 0
    %14 = vsyncpa [#allocation9], 0
    %15 = vsyncpa [#allocation4], 0
    // Predicated region
    $region2: #{tpu_custom_call.1} parent=1 // pred_check
      _
    $region3: #{tpu_custom_call.1} parent=1 // pred_check_branch
      %17 = sbr.rel (0) target = $region5
    $region4: #{tpu_custom_call.1} parent=1 // pred_region
      %s19 = ssub.s32 128, 128
      %20 = vsyncadd [#allocation3], %s19
      %s22 = sshll.u32 [#allocation2], 4
      %s23 = int_to_ptr.vmem [resolvable:$true] %s22
      %25 = dma.hbm_to_vmem [thread:$0]  %s0, 128, %s23, [#allocation3]
    $region5: #{tpu_custom_call.1} parent=1 // pred_fallthru
      _
    // Predicated region
    $region6: #{tpu_custom_call.1} parent=1 // pred_check
      _
    $region7: #{tpu_custom_call.1} parent=1 // pred_check_branch
      %27 = sbr.rel (0) target = $region9
    $region8: #{tpu_custom_call.1} parent=1 // pred_region
      %s29 = ssub.s32 256, 256
      %30 = vsyncadd [#allocation6], %s29
      %s31 = sshll.u32 [#allocation5], 4
      %s32 = int_to_ptr.vmem [resolvable:$true] %s31
      %37 = dma.hbm_to_vmem [thread:$0]  %s1, 256, %s32, [#allocation6], 128, 128, 8
    $region9: #{tpu_custom_call.1} parent=1 // pred_fallthru
      _
    // Predicated region
    $region10: #{tpu_custom_call.1} parent=1 // pred_check
      _
    $region11: #{tpu_custom_call.1} parent=1 // pred_check_branch
      %39 = sbr.rel (0) target = $region13
    $region12: #{tpu_custom_call.1} parent=1 // pred_region
      _
    $region13: #{tpu_custom_call.1} parent=1 // pred_fallthru
      _
    // Predicated region
    $region14: #{tpu_custom_call.1} parent=1 // pred_check
      _
    $region15: #{tpu_custom_call.1} parent=1 // pred_check_branch
      %41 = sbr.rel (0) target = $region17
    $region16: #{tpu_custom_call.1} parent=1 // pred_region
      %s43 = ssub.s32 8192, 8192
      %44 = vsyncadd [#allocation6], %s43
      %s45 = sshll.u32 [#allocation7], 4
      %s46 = int_to_ptr.vmem [resolvable:$true] %s45
      %51 = dma.hbm_to_vmem [thread:$0]  %s3, 8192, %s46, [#allocation6], 512, 512, 32
    $region17: #{tpu_custom_call.1} parent=1 // pred_fallthru
      _
    // Predicated region
    $region18: #{tpu_custom_call.1} parent=1 // pred_check
      _
    $region19: #{tpu_custom_call.1} parent=1 // pred_check_branch
      %53 = sbr.rel (0) target = $region21
    $region20: #{tpu_custom_call.1} parent=1 // pred_region
      _
    $region21: #{tpu_custom_call.1} parent=1 // pred_fallthru
      _
    // Predicated region
    $region22: #{tpu_custom_call.1} parent=1 // pred_check
      _
    $region23: #{tpu_custom_call.1} parent=1 // pred_check_branch
      %55 = sbr.rel (0) target = $region25
    $region24: #{tpu_custom_call.1} parent=1 // pred_region
      %s57 = ssub.s32 8192, 8192
      %58 = vsyncadd [#allocation9], %s57
      %s59 = sshll.u32 [#allocation8], 4
      %s60 = int_to_ptr.vmem [resolvable:$true] %s59
      %65 = dma.hbm_to_vmem [thread:$0]  %s5, 8192, %s60, [#allocation9], 128, 128, 8
    $region25: #{tpu_custom_call.1} parent=1 // pred_fallthru
      _
    // Predicated region
    $region26: #{tpu_custom_call.1} parent=1 // pred_check
      _
    $region27: #{tpu_custom_call.1} parent=1 // pred_check_branch
      %67 = sbr.rel (0) target = $region29
    $region28: #{tpu_custom_call.1} parent=1 // pred_region
      _
    $region29: #{tpu_custom_call.1} parent=1 // pred_fallthru
      _
    // Predicated region
    $region30: #{tpu_custom_call.1} parent=1 // pred_check
      _
    $region31: #{tpu_custom_call.1} parent=1 // pred_check_branch
      %69 = sbr.rel (0) target = $region33
    $region32: #{tpu_custom_call.1} parent=1 // pred_region
      %70 = dma.done [#allocation3], 128
    $region33: #{tpu_custom_call.1} parent=1 // pred_fallthru
      _
    // Predicated region
    $region34: #{tpu_custom_call.1} parent=1 // pred_check
      _
    $region35: #{tpu_custom_call.1} parent=1 // pred_check_branch
      %72 = sbr.rel (0) target = $region37
    $region36: #{tpu_custom_call.1} parent=1 // pred_region
      %73 = dma.done [#allocation6], 256
    $region37: #{tpu_custom_call.1} parent=1 // pred_fallthru
      _
    // Predicated region
    $region38: #{tpu_custom_call.1} parent=1 // pred_check
      _
    $region39: #{tpu_custom_call.1} parent=1 // pred_check_branch
      %75 = sbr.rel (0) target = $region41
    $region40: #{tpu_custom_call.1} parent=1 // pred_region
      %76 = dma.done [#allocation6], 8192
    $region41: #{tpu_custom_call.1} parent=1 // pred_fallthru
      _
    // Predicated region
    $region42: #{tpu_custom_call.1} parent=1 // pred_check
      _
    $region43: #{tpu_custom_call.1} parent=1 // pred_check_branch
      %78 = sbr.rel (0) target = $region45
    $region44: #{tpu_custom_call.1} parent=1 // pred_region
      %79 = dma.done [#allocation9], 8192
    $region45: #{tpu_custom_call.1} parent=1 // pred_fallthru
      _
    %v80 = vld [vmem:[#allocation2] sm:$0xff]
    %v81 = vld [vmem:[#allocation5] sm:$0xff]
    %v82 = vld [vmem:[#allocation5 + $0x8] sm:$0xff]
    %v83 = vld [vmem:[%s2] sm:$0x1]
    %v85 = vlaneseq
    %v86 = vshrl.u32 %v85, 7
    %v87 = vsub.s32 0, %v86
    %v88 = vrot.slane %v83, %v87
    %vm90 = vcmask 130048
    %v92 = vsel %vm90, %v80, 0
    %94 = vmatprep.subr.mxu0 0.0
    %95 = vmatpush1.msra.mxu0 %v81
    %96 = vmatprep.subr.mxu0 0.0
    %97 = vmatpush1.msra.mxu0 %v82
    %98 = vmatprep.subr.mxu0 0.0
    %99 = vmatpush1.msra.mxu0 0.0
    %100 = vmatprep.subr.mxu0 0.0
    %101 = vmatpush1.msra.mxu0 0.0
    %102 = vmatprep.subr.mxu0 0.0
    %103 = vmatpush1.msra.mxu0 0.0
    %104 = vmatprep.subr.mxu0 0.0
    %105 = vmatpush1.msra.mxu0 0.0
    %106 = vmatprep.subr.mxu0 0.0
    %107 = vmatpush1.msra.mxu0 0.0
    %108 = vmatprep.subr.mxu0 0.0
    %109 = vmatpush1.msra.mxu0 0.0
    %110 = vmatprep.subr.mxu0 0.0
    %111 = vmatpush1.msra.mxu0 0.0
    %112 = vmatprep.subr.mxu0 0.0
    %113 = vmatpush1.msra.mxu0 0.0
    %114 = vmatprep.subr.mxu0 0.0
    %115 = vmatpush1.msra.mxu0 0.0
    %116 = vmatprep.subr.mxu0 0.0
    %117 = vmatpush1.msra.mxu0 0.0
    %118 = vmatprep.subr.mxu0 0.0
    %119 = vmatpush1.msra.mxu0 0.0
    %120 = vmatprep.subr.mxu0 0.0
    %121 = vmatpush1.msra.mxu0 0.0
    %122 = vmatprep.subr.mxu0 0.0
    %123 = vmatpush1.msra.mxu0 0.0
    %124 = vmatprep.subr.mxu0 0.0
    %125 = vmatpush1.msra.mxu0 0.0
    %126 = vmatprep.subr.mxu0 0.0
    %127 = vmatpush1.msra.mxu0 0.0
    %128 = vmatprep.subr.mxu0 0.0
    %129 = vmatpush1.msra.mxu0 0.0
    %130 = vmatprep.subr.mxu0 0.0
    %131 = vmatpush1.msra.mxu0 0.0
    %132 = vmatprep.subr.mxu0 0.0
    %133 = vmatpush1.msra.mxu0 0.0
    %134 = vmatprep.subr.mxu0 0.0
    %135 = vmatpush1.msra.mxu0 0.0
    %136 = vmatprep.subr.mxu0 0.0
    %137 = vmatpush1.msra.mxu0 0.0
    %138 = vmatprep.subr.mxu0 0.0
    %139 = vmatpush1.msra.mxu0 0.0
    %140 = vmatprep.subr.mxu0 0.0
    %141 = vmatpush1.msra.mxu0 0.0
    %142 = vmatprep.subr.mxu0 0.0
    %143 = vmatpush1.msra.mxu0 0.0
    %144 = vmatprep.subr.mxu0 0.0
    %145 = vmatpush1.msra.mxu0 0.0
    %146 = vmatprep.subr.mxu0 0.0
    %147 = vmatpush1.msra.mxu0 0.0
    %148 = vmatprep.subr.mxu0 0.0
    %149 = vmatpush1.msra.mxu0 0.0
    %150 = vmatprep.subr.mxu0 0.0
    %151 = vmatpush1.msra.mxu0 0.0
    %152 = vmatprep.subr.mxu0 0.0
    %153 = vmatpush1.msra.mxu0 0.0
    %154 = vmatprep.subr.mxu0 0.0
    %155 = vmatpush1.msra.mxu0 0.0
    %156 = vmatprep.subr.mxu0 0.0
    %157 = vmatpush1.msra.mxu0 0.0
    %158 = vmatprep.mubr.f32.mxu0 0.0
    %159 = vmatmul.mubr.f32.gmra.mrb[0].mxu0 %v92
    %v160 = vpop.f32.mrb[0].mxu0
    %v161 = vadd.f32 %v88, %v160
    %v162 = vpop.f32.mrb[0].mxu0
    %163 = vdwg.mxu0
    %v164 = vmax.f32 %v161, 0.0
    %v165 = vld [vmem:[#allocation7] sm:$0xff]
    %v166 = vld [vmem:[#allocation7 + $0x8] sm:$0xff]
    %v167 = vld [vmem:[#allocation7 + $0x10] sm:$0xff]
    %v168 = vld [vmem:[#allocation7 + $0x18] sm:$0xff]
    %v169 = vld [vmem:[#allocation7 + $0x20] sm:$0xff]
    %v170 = vld [vmem:[#allocation7 + $0x28] sm:$0xff]
    %v171 = vld [vmem:[#allocation7 + $0x30] sm:$0xff]
    %v172 = vld [vmem:[#allocation7 + $0x38] sm:$0xff]
    %v173 = vld [vmem:[#allocation7 + $0x40] sm:$0xff]
    %v174 = vld [vmem:[#allocation7 + $0x48] sm:$0xff]
    %v175 = vld [vmem:[#allocation7 + $0x50] sm:$0xff]
    %v176 = vld [vmem:[#allocation7 + $0x58] sm:$0xff]
    %v177 = vld [vmem:[#allocation7 + $0x60] sm:$0xff]
    %v178 = vld [vmem:[#allocation7 + $0x68] sm:$0xff]
    %v179 = vld [vmem:[#allocation7 + $0x70] sm:$0xff]
    %v180 = vld [vmem:[#allocation7 + $0x78] sm:$0xff]
    %v181 = vld [vmem:[#allocation7 + $0x80] sm:$0xff]
    %v182 = vld [vmem:[#allocation7 + $0x88] sm:$0xff]
    %v183 = vld [vmem:[#allocation7 + $0x90] sm:$0xff]
    %v184 = vld [vmem:[#allocation7 + $0x98] sm:$0xff]
    %v185 = vld [vmem:[#allocation7 + $0xa0] sm:$0xff]
    %v186 = vld [vmem:[#allocation7 + $0xa8] sm:$0xff]
    %v187 = vld [vmem:[#allocation7 + $0xb0] sm:$0xff]
    %v188 = vld [vmem:[#allocation7 + $0xb8] sm:$0xff]
    %v189 = vld [vmem:[#allocation7 + $0xc0] sm:$0xff]
    %v190 = vld [vmem:[#allocation7 + $0xc8] sm:$0xff]
    %v191 = vld [vmem:[#allocation7 + $0xd0] sm:$0xff]
    %v192 = vld [vmem:[#allocation7 + $0xd8] sm:$0xff]
    %v193 = vld [vmem:[#allocation7 + $0xe0] sm:$0xff]
    %v194 = vld [vmem:[#allocation7 + $0xe8] sm:$0xff]
    %v195 = vld [vmem:[#allocation7 + $0xf0] sm:$0xff]
    %v196 = vld [vmem:[#allocation7 + $0xf8] sm:$0xff]
    %v197 = vld [vmem:[#allocation7 + $0x100] sm:$0xff]
    %v198 = vld [vmem:[#allocation7 + $0x108] sm:$0xff]
    %v199 = vld [vmem:[#allocation7 + $0x110] sm:$0xff]
    %v200 = vld [vmem:[#allocation7 + $0x118] sm:$0xff]
    %v201 = vld [vmem:[#allocation7 + $0x120] sm:$0xff]
    %v202 = vld [vmem:[#allocation7 + $0x128] sm:$0xff]
    %v203 = vld [vmem:[#allocation7 + $0x130] sm:$0xff]
    %v204 = vld [vmem:[#allocation7 + $0x138] sm:$0xff]
    %v205 = vld [vmem:[#allocation7 + $0x140] sm:$0xff]
    %v206 = vld [vmem:[#allocation7 + $0x148] sm:$0xff]
    %v207 = vld [vmem:[#allocation7 + $0x150] sm:$0xff]
    %v208 = vld [vmem:[#allocation7 + $0x158] sm:$0xff]
    %v209 = vld [vmem:[#allocation7 + $0x160] sm:$0xff]
    %v210 = vld [vmem:[#allocation7 + $0x168] sm:$0xff]
    %v211 = vld [vmem:[#allocation7 + $0x170] sm:$0xff]
    %v212 = vld [vmem:[#allocation7 + $0x178] sm:$0xff]
    %v213 = vld [vmem:[#allocation7 + $0x180] sm:$0xff]
    %v214 = vld [vmem:[#allocation7 + $0x188] sm:$0xff]
    %v215 = vld [vmem:[#allocation7 + $0x190] sm:$0xff]
    %v216 = vld [vmem:[#allocation7 + $0x198] sm:$0xff]
    %v217 = vld [vmem:[#allocation7 + $0x1a0] sm:$0xff]
    %v218 = vld [vmem:[#allocation7 + $0x1a8] sm:$0xff]
    %v219 = vld [vmem:[#allocation7 + $0x1b0] sm:$0xff]
    %v220 = vld [vmem:[#allocation7 + $0x1b8] sm:$0xff]
    %v221 = vld [vmem:[#allocation7 + $0x1c0] sm:$0xff]
    %v222 = vld [vmem:[#allocation7 + $0x1c8] sm:$0xff]
    %v223 = vld [vmem:[#allocation7 + $0x1d0] sm:$0xff]
    %v224 = vld [vmem:[#allocation7 + $0x1d8] sm:$0xff]
    %v225 = vld [vmem:[#allocation7 + $0x1e0] sm:$0xff]
    %v226 = vld [vmem:[#allocation7 + $0x1e8] sm:$0xff]
    %v227 = vld [vmem:[#allocation7 + $0x1f0] sm:$0xff]
    %v228 = vld [vmem:[#allocation7 + $0x1f8] sm:$0xff]
    %v229 = vld [vmem:[%s4] sm:$0xf]
    %v231 = vlaneseq
    %v232 = vshrl.u32 %v231, 7
    %v233 = vsub.s32 0, %v232
    %v234 = vrot.slane %v229, %v233
    %v235 = vlaneseq
    %v236 = vshrl.u32 %v235, 7
    %v237 = vsub.s32 1, %v236
    %v238 = vrot.slane %v229, %v237
    %v239 = vlaneseq
    %v240 = vshrl.u32 %v239, 7
    %v241 = vsub.s32 2, %v240
    %v242 = vrot.slane %v229, %v241
    %v243 = vlaneseq
    %v244 = vshrl.u32 %v243, 7
    %v245 = vsub.s32 3, %v244
    %v246 = vrot.slane %v229, %v245
    %251 = vmatprep.subr.mxu0 %v166
    %252 = vmatpush1.msra.mxu0 %v165
    %253 = vmatprep.subr.mxu0 %v170
    %254 = vmatpush1.msra.mxu0 %v169
    %255 = vmatprep.subr.mxu0 %v174
    %256 = vmatpush1.msra.mxu0 %v173
    %257 = vmatprep.subr.mxu0 %v178
    %258 = vmatpush1.msra.mxu0 %v177
    %259 = vmatprep.subr.mxu0 %v182
    %260 = vmatpush1.msra.mxu0 %v181
    %261 = vmatprep.subr.mxu0 %v186
    %262 = vmatpush1.msra.mxu0 %v185
    %263 = vmatprep.subr.mxu0 %v190
    %264 = vmatpush1.msra.mxu0 %v189
    %265 = vmatprep.subr.mxu0 %v194
    %266 = vmatpush1.msra.mxu0 %v193
    %267 = vmatprep.subr.mxu0 %v198
    %268 = vmatpush1.msra.mxu0 %v197
    %269 = vmatprep.subr.mxu0 %v202
    %270 = vmatpush1.msra.mxu0 %v201
    %271 = vmatprep.subr.mxu0 %v206
    %272 = vmatpush1.msra.mxu0 %v205
    %273 = vmatprep.subr.mxu0 %v210
    %274 = vmatpush1.msra.mxu0 %v209
    %275 = vmatprep.subr.mxu0 %v214
    %276 = vmatpush1.msra.mxu0 %v213
    %277 = vmatprep.subr.mxu0 %v218
    %278 = vmatpush1.msra.mxu0 %v217
    %279 = vmatprep.subr.mxu0 %v222
    %280 = vmatpush1.msra.mxu0 %v221
    %281 = vmatprep.subr.mxu0 %v226
    %282 = vmatpush1.msra.mxu0 %v225
    %283 = vmatprep.subr.mxu0 0.0
    %284 = vmatpush1.msra.mxu0 0.0
    %285 = vmatprep.subr.mxu0 0.0
    %286 = vmatpush1.msra.mxu0 0.0
    %287 = vmatprep.subr.mxu0 0.0
    %288 = vmatpush1.msra.mxu0 0.0
    %289 = vmatprep.subr.mxu0 0.0
    %290 = vmatpush1.msra.mxu0 0.0
    %291 = vmatprep.subr.mxu0 0.0
    %292 = vmatpush1.msra.mxu0 0.0
    %293 = vmatprep.subr.mxu0 0.0
    %294 = vmatpush1.msra.mxu0 0.0
    %295 = vmatprep.subr.mxu0 0.0
    %296 = vmatpush1.msra.mxu0 0.0
    %297 = vmatprep.subr.mxu0 0.0
    %298 = vmatpush1.msra.mxu0 0.0
    %299 = vmatprep.subr.mxu0 0.0
    %300 = vmatpush1.msra.mxu0 0.0
    %301 = vmatprep.subr.mxu0 0.0
    %302 = vmatpush1.msra.mxu0 0.0
    %303 = vmatprep.subr.mxu0 0.0
    %304 = vmatpush1.msra.mxu0 0.0
    %305 = vmatprep.subr.mxu0 0.0
    %306 = vmatpush1.msra.mxu0 0.0
    %307 = vmatprep.subr.mxu0 0.0
    %308 = vmatpush1.msra.mxu0 0.0
    %309 = vmatprep.subr.mxu0 0.0
    %310 = vmatpush1.msra.mxu0 0.0
    %311 = vmatprep.subr.mxu0 0.0
    %312 = vmatpush1.msra.mxu0 0.0
    %313 = vmatprep.subr.mxu0 0.0
    %314 = vmatpush1.msra.mxu0 0.0
    %315 = vmatprep.mubr.f32.mxu0 0.0
    %316 = vmatmul.mubr.f32.gmra.mrb[0].mxu0 %v164
    %v317 = vpop.f32.mrb[0].mxu0
    %v318 = vadd.f32 %v234, %v317
    %v319 = vpop.f32.mrb[0].mxu0
    %v320 = vadd.f32 %v238, %v319
    %321 = vdwg.mxu0
    %322 = vmatprep.subr.mxu0 %v168
    %323 = vmatpush1.msra.mxu0 %v167
    %324 = vmatprep.subr.mxu0 %v172
    %325 = vmatpush1.msra.mxu0 %v171
    %326 = vmatprep.subr.mxu0 %v176
    %327 = vmatpush1.msra.mxu0 %v175
    %328 = vmatprep.subr.mxu0 %v180
    %329 = vmatpush1.msra.mxu0 %v179
    %330 = vmatprep.subr.mxu0 %v184
    %331 = vmatpush1.msra.mxu0 %v183
    %332 = vmatprep.subr.mxu0 %v188
    %333 = vmatpush1.msra.mxu0 %v187
    %334 = vmatprep.subr.mxu0 %v192
    %335 = vmatpush1.msra.mxu0 %v191
    %336 = vmatprep.subr.mxu0 %v196
    %337 = vmatpush1.msra.mxu0 %v195
    %338 = vmatprep.subr.mxu0 %v200
    %339 = vmatpush1.msra.mxu0 %v199
    %340 = vmatprep.subr.mxu0 %v204
    %341 = vmatpush1.msra.mxu0 %v203
    %342 = vmatprep.subr.mxu0 %v208
    %343 = vmatpush1.msra.mxu0 %v207
    %344 = vmatprep.subr.mxu0 %v212
    %345 = vmatpush1.msra.mxu0 %v211
    %346 = vmatprep.subr.mxu0 %v216
    %347 = vmatpush1.msra.mxu0 %v215
    %348 = vmatprep.subr.mxu0 %v220
    %349 = vmatpush1.msra.mxu0 %v219
    %350 = vmatprep.subr.mxu0 %v224
    %351 = vmatpush1.msra.mxu0 %v223
    %352 = vmatprep.subr.mxu0 %v228
    %353 = vmatpush1.msra.mxu0 %v227
    %354 = vmatprep.subr.mxu0 0.0
    %355 = vmatpush1.msra.mxu0 0.0
    %356 = vmatprep.subr.mxu0 0.0
    %357 = vmatpush1.msra.mxu0 0.0
    %358 = vmatprep.subr.mxu0 0.0
    %359 = vmatpush1.msra.mxu0 0.0
    %360 = vmatprep.subr.mxu0 0.0
    %361 = vmatpush1.msra.mxu0 0.0
    %362 = vmatprep.subr.mxu0 0.0
    %363 = vmatpush1.msra.mxu0 0.0
    %364 = vmatprep.subr.mxu0 0.0
    %365 = vmatpush1.msra.mxu0 0.0
    %366 = vmatprep.subr.mxu0 0.0
    %367 = vmatpush1.msra.mxu0 0.0
    %368 = vmatprep.subr.mxu0 0.0
    %369 = vmatpush1.msra.mxu0 0.0
    %370 = vmatprep.subr.mxu0 0.0
    %371 = vmatpush1.msra.mxu0 0.0
    %372 = vmatprep.subr.mxu0 0.0
    %373 = vmatpush1.msra.mxu0 0.0
    %374 = vmatprep.subr.mxu0 0.0
    %375 = vmatpush1.msra.mxu0 0.0
    %376 = vmatprep.subr.mxu0 0.0
    %377 = vmatpush1.msra.mxu0 0.0
    %378 = vmatprep.subr.mxu0 0.0
    %379 = vmatpush1.msra.mxu0 0.0
    %380 = vmatprep.subr.mxu0 0.0
    %381 = vmatpush1.msra.mxu0 0.0
    %382 = vmatprep.subr.mxu0 0.0
    %383 = vmatpush1.msra.mxu0 0.0
    %384 = vmatprep.subr.mxu0 0.0
    %385 = vmatpush1.msra.mxu0 0.0
    %386 = vmatprep.mubr.f32.mxu0 0.0
    %387 = vmatmul.mubr.f32.gmra.mrb[0].mxu0 %v164
    %v388 = vpop.f32.mrb[0].mxu0
    %v389 = vadd.f32 %v242, %v388
    %v390 = vpop.f32.mrb[0].mxu0
    %v391 = vadd.f32 %v246, %v390
    %392 = vdwg.mxu0
    %v393 = vmax.f32 %v318, 0.0
    %v394 = vmax.f32 %v320, 0.0
    %v395 = vmax.f32 %v389, 0.0
    %v396 = vmax.f32 %v391, 0.0
    %v397 = vld [vmem:[#allocation8] sm:$0xff]
    %v398 = vld [vmem:[#allocation8 + $0x8] sm:$0xff]
    %v399 = vld [vmem:[#allocation8 + $0x10] sm:$0xff]
    %v400 = vld [vmem:[#allocation8 + $0x18] sm:$0xff]
    %v401 = vld [vmem:[#allocation8 + $0x20] sm:$0xff]
    %v402 = vld [vmem:[#allocation8 + $0x28] sm:$0xff]
    %v403 = vld [vmem:[#allocation8 + $0x30] sm:$0xff]
    %v404 = vld [vmem:[#allocation8 + $0x38] sm:$0xff]
    %v405 = vld [vmem:[#allocation8 + $0x40] sm:$0xff]
    %v406 = vld [vmem:[#allocation8 + $0x48] sm:$0xff]
    %v407 = vld [vmem:[#allocation8 + $0x50] sm:$0xff]
    %v408 = vld [vmem:[#allocation8 + $0x58] sm:$0xff]
    %v409 = vld [vmem:[#allocation8 + $0x60] sm:$0xff]
    %v410 = vld [vmem:[#allocation8 + $0x68] sm:$0xff]
    %v411 = vld [vmem:[#allocation8 + $0x70] sm:$0xff]
    %v412 = vld [vmem:[#allocation8 + $0x78] sm:$0xff]
    %v413 = vld [vmem:[#allocation8 + $0x80] sm:$0xff]
    %v414 = vld [vmem:[#allocation8 + $0x88] sm:$0xff]
    %v415 = vld [vmem:[#allocation8 + $0x90] sm:$0xff]
    %v416 = vld [vmem:[#allocation8 + $0x98] sm:$0xff]
    %v417 = vld [vmem:[#allocation8 + $0xa0] sm:$0xff]
    %v418 = vld [vmem:[#allocation8 + $0xa8] sm:$0xff]
    %v419 = vld [vmem:[#allocation8 + $0xb0] sm:$0xff]
    %v420 = vld [vmem:[#allocation8 + $0xb8] sm:$0xff]
    %v421 = vld [vmem:[#allocation8 + $0xc0] sm:$0xff]
    %v422 = vld [vmem:[#allocation8 + $0xc8] sm:$0xff]
    %v423 = vld [vmem:[#allocation8 + $0xd0] sm:$0xff]
    %v424 = vld [vmem:[#allocation8 + $0xd8] sm:$0xff]
    %v425 = vld [vmem:[#allocation8 + $0xe0] sm:$0xff]
    %v426 = vld [vmem:[#allocation8 + $0xe8] sm:$0xff]
    %v427 = vld [vmem:[#allocation8 + $0xf0] sm:$0xff]
    %v428 = vld [vmem:[#allocation8 + $0xf8] sm:$0xff]
    %v429 = vld [vmem:[#allocation8 + $0x100] sm:$0xff]
    %v430 = vld [vmem:[#allocation8 + $0x108] sm:$0xff]
    %v431 = vld [vmem:[#allocation8 + $0x110] sm:$0xff]
    %v432 = vld [vmem:[#allocation8 + $0x118] sm:$0xff]
    %v433 = vld [vmem:[#allocation8 + $0x120] sm:$0xff]
    %v434 = vld [vmem:[#allocation8 + $0x128] sm:$0xff]
    %v435 = vld [vmem:[#allocation8 + $0x130] sm:$0xff]
    %v436 = vld [vmem:[#allocation8 + $0x138] sm:$0xff]
    %v437 = vld [vmem:[#allocation8 + $0x140] sm:$0xff]
    %v438 = vld [vmem:[#allocation8 + $0x148] sm:$0xff]
    %v439 = vld [vmem:[#allocation8 + $0x150] sm:$0xff]
    %v440 = vld [vmem:[#allocation8 + $0x158] sm:$0xff]
    %v441 = vld [vmem:[#allocation8 + $0x160] sm:$0xff]
    %v442 = vld [vmem:[#allocation8 + $0x168] sm:$0xff]
    %v443 = vld [vmem:[#allocation8 + $0x170] sm:$0xff]
    %v444 = vld [vmem:[#allocation8 + $0x178] sm:$0xff]
    %v445 = vld [vmem:[#allocation8 + $0x180] sm:$0xff]
    %v446 = vld [vmem:[#allocation8 + $0x188] sm:$0xff]
    %v447 = vld [vmem:[#allocation8 + $0x190] sm:$0xff]
    %v448 = vld [vmem:[#allocation8 + $0x198] sm:$0xff]
    %v449 = vld [vmem:[#allocation8 + $0x1a0] sm:$0xff]
    %v450 = vld [vmem:[#allocation8 + $0x1a8] sm:$0xff]
    %v451 = vld [vmem:[#allocation8 + $0x1b0] sm:$0xff]
    %v452 = vld [vmem:[#allocation8 + $0x1b8] sm:$0xff]
    %v453 = vld [vmem:[#allocation8 + $0x1c0] sm:$0xff]
    %v454 = vld [vmem:[#allocation8 + $0x1c8] sm:$0xff]
    %v455 = vld [vmem:[#allocation8 + $0x1d0] sm:$0xff]
    %v456 = vld [vmem:[#allocation8 + $0x1d8] sm:$0xff]
    %v457 = vld [vmem:[#allocation8 + $0x1e0] sm:$0xff]
    %v458 = vld [vmem:[#allocation8 + $0x1e8] sm:$0xff]
    %v459 = vld [vmem:[#allocation8 + $0x1f0] sm:$0xff]
    %v460 = vld [vmem:[#allocation8 + $0x1f8] sm:$0xff]
    %v461 = vld [vmem:[%s6] sm:$0x1]
    %v463 = vlaneseq
    %v464 = vshrl.u32 %v463, 7
    %v465 = vsub.s32 0, %v464
    %v466 = vrot.slane %v461, %v465
    %468 = vmatprep.subr.mxu0 0.0
    %469 = vmatpush1.msra.mxu0 %v397
    %470 = vmatprep.subr.mxu0 0.0
    %471 = vmatpush1.msra.mxu0 %v398
    %472 = vmatprep.subr.mxu0 0.0
    %473 = vmatpush1.msra.mxu0 %v399
    %474 = vmatprep.subr.mxu0 0.0
    %475 = vmatpush1.msra.mxu0 %v400
    %476 = vmatprep.subr.mxu0 0.0
    %477 = vmatpush1.msra.mxu0 %v401
    %478 = vmatprep.subr.mxu0 0.0
    %479 = vmatpush1.msra.mxu0 %v402
    %480 = vmatprep.subr.mxu0 0.0
    %481 = vmatpush1.msra.mxu0 %v403
    %482 = vmatprep.subr.mxu0 0.0
    %483 = vmatpush1.msra.mxu0 %v404
    %484 = vmatprep.subr.mxu0 0.0
    %485 = vmatpush1.msra.mxu0 %v405
    %486 = vmatprep.subr.mxu0 0.0
    %487 = vmatpush1.msra.mxu0 %v406
    %488 = vmatprep.subr.mxu0 0.0
    %489 = vmatpush1.msra.mxu0 %v407
    %490 = vmatprep.subr.mxu0 0.0
    %491 = vmatpush1.msra.mxu0 %v408
    %492 = vmatprep.subr.mxu0 0.0
    %493 = vmatpush1.msra.mxu0 %v409
    %494 = vmatprep.subr.mxu0 0.0
    %495 = vmatpush1.msra.mxu0 %v410
    %496 = vmatprep.subr.mxu0 0.0
    %497 = vmatpush1.msra.mxu0 %v411
    %498 = vmatprep.subr.mxu0 0.0
    %499 = vmatpush1.msra.mxu0 %v412
    %500 = vmatprep.subr.mxu0 0.0
    %501 = vmatpush1.msra.mxu0 %v413
    %502 = vmatprep.subr.mxu0 0.0
    %503 = vmatpush1.msra.mxu0 %v414
    %504 = vmatprep.subr.mxu0 0.0
    %505 = vmatpush1.msra.mxu0 %v415
    %506 = vmatprep.subr.mxu0 0.0
    %507 = vmatpush1.msra.mxu0 %v416
    %508 = vmatprep.subr.mxu0 0.0
    %509 = vmatpush1.msra.mxu0 %v417
    %510 = vmatprep.subr.mxu0 0.0
    %511 = vmatpush1.msra.mxu0 %v418
    %512 = vmatprep.subr.mxu0 0.0
    %513 = vmatpush1.msra.mxu0 %v419
    %514 = vmatprep.subr.mxu0 0.0
    %515 = vmatpush1.msra.mxu0 %v420
    %516 = vmatprep.subr.mxu0 0.0
    %517 = vmatpush1.msra.mxu0 %v421
    %518 = vmatprep.subr.mxu0 0.0
    %519 = vmatpush1.msra.mxu0 %v422
    %520 = vmatprep.subr.mxu0 0.0
    %521 = vmatpush1.msra.mxu0 %v423
    %522 = vmatprep.subr.mxu0 0.0
    %523 = vmatpush1.msra.mxu0 %v424
    %524 = vmatprep.subr.mxu0 0.0
    %525 = vmatpush1.msra.mxu0 %v425
    %526 = vmatprep.subr.mxu0 0.0
    %527 = vmatpush1.msra.mxu0 %v426
    %528 = vmatprep.subr.mxu0 0.0
    %529 = vmatpush1.msra.mxu0 %v427
    %530 = vmatprep.subr.mxu0 0.0
    %531 = vmatpush1.msra.mxu0 %v428
    %532 = vmatprep.mubr.f32.mxu0 %v394
    %533 = vmatmul.mubr.f32.gmra.mrb[0].mxu0 %v393
    %v534 = vpop.f32.mrb[0].mxu0
    %v535 = vadd.f32 %v466, %v534
    %v536 = vpop.f32.mrb[0].mxu0
    %537 = vdwg.mxu0
    %538 = vmatprep.subr.mxu0 0.0
    %539 = vmatpush1.msra.mxu0 %v429
    %540 = vmatprep.subr.mxu0 0.0
    %541 = vmatpush1.msra.mxu0 %v430
    %542 = vmatprep.subr.mxu0 0.0
    %543 = vmatpush1.msra.mxu0 %v431
    %544 = vmatprep.subr.mxu0 0.0
    %545 = vmatpush1.msra.mxu0 %v432
    %546 = vmatprep.subr.mxu0 0.0
    %547 = vmatpush1.msra.mxu0 %v433
    %548 = vmatprep.subr.mxu0 0.0
    %549 = vmatpush1.msra.mxu0 %v434
    %550 = vmatprep.subr.mxu0 0.0
    %551 = vmatpush1.msra.mxu0 %v435
    %552 = vmatprep.subr.mxu0 0.0
    %553 = vmatpush1.msra.mxu0 %v436
    %554 = vmatprep.subr.mxu0 0.0
    %555 = vmatpush1.msra.mxu0 %v437
    %556 = vmatprep.subr.mxu0 0.0
    %557 = vmatpush1.msra.mxu0 %v438
    %558 = vmatprep.subr.mxu0 0.0
    %559 = vmatpush1.msra.mxu0 %v439
    %560 = vmatprep.subr.mxu0 0.0
    %561 = vmatpush1.msra.mxu0 %v440
    %562 = vmatprep.subr.mxu0 0.0
    %563 = vmatpush1.msra.mxu0 %v441
    %564 = vmatprep.subr.mxu0 0.0
    %565 = vmatpush1.msra.mxu0 %v442
    %566 = vmatprep.subr.mxu0 0.0
    %567 = vmatpush1.msra.mxu0 %v443
    %568 = vmatprep.subr.mxu0 0.0
    %569 = vmatpush1.msra.mxu0 %v444
    %570 = vmatprep.subr.mxu0 0.0
    %571 = vmatpush1.msra.mxu0 %v445
    %572 = vmatprep.subr.mxu0 0.0
    %573 = vmatpush1.msra.mxu0 %v446
    %574 = vmatprep.subr.mxu0 0.0
    %575 = vmatpush1.msra.mxu0 %v447
    %576 = vmatprep.subr.mxu0 0.0
    %577 = vmatpush1.msra.mxu0 %v448
    %578 = vmatprep.subr.mxu0 0.0
    %579 = vmatpush1.msra.mxu0 %v449
    %580 = vmatprep.subr.mxu0 0.0
    %581 = vmatpush1.msra.mxu0 %v450
    %582 = vmatprep.subr.mxu0 0.0
    %583 = vmatpush1.msra.mxu0 %v451
    %584 = vmatprep.subr.mxu0 0.0
    %585 = vmatpush1.msra.mxu0 %v452
    %586 = vmatprep.subr.mxu0 0.0
    %587 = vmatpush1.msra.mxu0 %v453
    %588 = vmatprep.subr.mxu0 0.0
    %589 = vmatpush1.msra.mxu0 %v454
    %590 = vmatprep.subr.mxu0 0.0
    %591 = vmatpush1.msra.mxu0 %v455
    %592 = vmatprep.subr.mxu0 0.0
    %593 = vmatpush1.msra.mxu0 %v456
    %594 = vmatprep.subr.mxu0 0.0
    %595 = vmatpush1.msra.mxu0 %v457
    %596 = vmatprep.subr.mxu0 0.0
    %597 = vmatpush1.msra.mxu0 %v458
    %598 = vmatprep.subr.mxu0 0.0
    %599 = vmatpush1.msra.mxu0 %v459
    %600 = vmatprep.subr.mxu0 0.0
    %601 = vmatpush1.msra.mxu0 %v460
    %602 = vmatprep.mubr.f32.mxu0 %v396
    %603 = vmatmul.mubr.f32.gmra.mrb[0].mxu0 %v395
    %v604 = vpop.f32.mrb[0].mxu0
    %v605 = vadd.f32 %v535, %v604
    %v606 = vpop.f32.mrb[0].mxu0
    %607 = vdwg.mxu0
    %608 = vadd.xlane.f32.xlu0 %v605
    %v609 = vpop.xlane.xlu0 %608
    %v610 = vsub.f32 %v609, %v605
    %v611 = vmul.f32 %v610, 0.16666667
    %613 = vset.pattern.permute.xlu0 127
    %614 = vperm.xlu0 %613, %v605
    %v615 = vpop.permute.xlu0 %614
    %v617 = vadd.f32 %v605, %v615
    %619 = vset.pattern.permute.xlu0 127
    %620 = vperm.xlu0 %619, %v611
    %v621 = vpop.permute.xlu0 %620
    %v623 = vsub.f32 %v617, %v621
    %624 = vst [vmem:[#allocation10] sm:$0xff] %v623
    // Predicated region
    $region46: #{tpu_custom_call.1} parent=1 // pred_check
      _
    $region47: #{tpu_custom_call.1} parent=1 // pred_check_branch
      %626 = sbr.rel (0) target = $region49
    $region48: #{tpu_custom_call.1} parent=1 // pred_region
      %s628 = ssub.s32 128, 128
      %629 = vsyncadd [#allocation4], %s628
      %s631 = sshll.u32 [#allocation10], 4
      %s632 = int_to_ptr.vmem [resolvable:$true] %s631
      %634 = dma.vmem_to_hbm [thread:$0]  %s632, 128, %s7, [#allocation4]
    $region49: #{tpu_custom_call.1} parent=1 // pred_fallthru
      _
    // Predicated region
    $region50: #{tpu_custom_call.1} parent=1 // pred_check
      _
    $region51: #{tpu_custom_call.1} parent=1 // pred_check_branch
      %636 = sbr.rel (0) target = $region53
    $region52: #{tpu_custom_call.1} parent=1 // pred_region
      %637 = dma.done [#allocation4], 128
    $region53: #{tpu_custom_call.1} parent=1 // pred_fallthru
      _
    %638 = vsyncpa [#allocation3], 1
    %639 = vsyncpa [#allocation6], 1
    %640 = vsyncpa [#allocation9], 1
    %641 = vsyncpa [#allocation4], 1

</llo_original>
